<compile_context>
chip_gen: v6e
topology: v6e:2x2x1
jax: 0.10.0
libtpu: 0.0.40
codegen_flags: <defaults>
</compile_context>

<pallas_src>
import functools
import math

import jax
import jax.numpy as jnp
from jax.experimental import pallas as pl
from jax.experimental.pallas import tpu as pltpu


def _adaptive_layer_norm_kernel(x_ref, w_ref, b_ref, o_ref, *, eps, feat, feat_p):
    # x_ref/o_ref block: (R, Fp) ; w_ref/b_ref block: (1, Fp), already f32.
    x = x_ref[...].astype(jnp.float32)
    inv_f = 1.0 / feat  # Python constant -> no runtime divide

    if feat == feat_p:
        # Feature dim already lane-dense; plain full-row reductions.
        mean = jnp.sum(x, axis=-1, keepdims=True) * inv_f
        xc = x - mean
        var = jnp.sum(xc * xc, axis=-1, keepdims=True) * inv_f   # biased variance
    else:
        # Feature dim was zero-padded to x128 in the wrapper: exclude padded
        # lanes from the statistics with a lane mask.
        col = jax.lax.broadcasted_iota(jnp.int32, x.shape, 1)
        valid = col < feat
        mean = jnp.sum(jnp.where(valid, x, 0.0), axis=-1, keepdims=True) * inv_f
        xc_m = jnp.where(valid, x - mean, 0.0)
        var = jnp.sum(xc_m * xc_m, axis=-1, keepdims=True) * inv_f
        xc = x - mean  # padded output lanes are sliced off by the wrapper

    inv = jax.lax.rsqrt(var + eps)
    y = xc * inv
    y = y * w_ref[...] + b_ref[...]
    o_ref[...] = y.astype(o_ref.dtype)


def adaptive_layer_norm(x, weight, bias, eps=1e-5):
    """x: (N, *). weight/bias: shape x.shape[1:] (per-element affine).

    Equivalent to PyTorch AdaptiveLayerNorm.forward after lazy init:
      F.layer_norm(x, x.shape[1:], weight, bias, eps)
    """
    orig_shape = x.shape
    n = x.shape[0]
    feat = math.prod(x.shape[1:])
    feat_p = ((feat + 127) // 128) * 128  # lane-dense feature dim

    x2 = x.reshape(n, feat)
    w2 = weight.reshape(1, feat).astype(jnp.float32)
    b2 = bias.reshape(1, feat).astype(jnp.float32)
    if feat_p != feat:
        pad = feat_p - feat
        x2 = jnp.pad(x2, ((0, 0), (0, pad)))
        w2 = jnp.pad(w2, ((0, 0), (0, pad)))
        b2 = jnp.pad(b2, ((0, 0), (0, pad)))

    # ---- Row-block (R) selection: biggest block that fits the VMEM budget ----
    # Double-buffered working set: 2*R*Fp*bytes (x) + 2*R*Fp*bytes (out)
    #                             + 2*Fp*4 (weight) + 2*Fp*4 (bias)
    x_bytes = jnp.dtype(x.dtype).itemsize
    vmem_budget = 24 * 1024 * 1024            # leave headroom under the 32 MiB limit
    param_bytes = 2 * 2 * feat_p * 4          # shared weight + bias, double-buffered
    per_row = 4 * feat_p * x_bytes            # x in + out, double-buffered
    r_max = max(0, (vmem_budget - param_bytes) // per_row)

    if r_max >= 8:
        r = min((r_max // 8) * 8, 512)        # multiple of 8 sublanes (f32 packing)
        # Keep >=2 grid steps when there is enough work so the "parallel" batch
        # axis can shard across v7x's two TensorCores.
        half_rows = ((((n + 1) // 2) + 7) // 8) * 8
        r = min(r, max(8, half_rows))
    else:
        # A single padded row + params does not leave room for an 8-row block.
        # TODO(synk): for extremely large F, add an F-tiled ("arbitrary" axis)
        # sum/sum-of-squares reduction path instead of this R=1 fallback.
        r = 1

    if r > 1:
        n_p = ((n + r - 1) // r) * r
        if n_p != n:
            x2 = jnp.pad(x2, ((0, n_p - n), (0, 0)))  # padded rows sliced off later
    else:
        n_p = n

    kernel = functools.partial(
        _adaptive_layer_norm_kernel, eps=eps, feat=feat, feat_p=feat_p)

    out2 = pl.pallas_call(
        kernel,
        out_shape=jax.ShapeDtypeStruct((n_p, feat_p), x.dtype),
        grid_spec=pltpu.PrefetchScalarGridSpec(
            num_scalar_prefetch=0,
            grid=(n_p // r,),
            in_specs=[
                pl.BlockSpec((r, feat_p), lambda i: (i, 0)),   # R rows of x
                pl.BlockSpec((1, feat_p), lambda i: (0, 0)),   # weight (shared)
                pl.BlockSpec((1, feat_p), lambda i: (0, 0)),   # bias (shared)
            ],
            out_specs=pl.BlockSpec((r, feat_p), lambda i: (i, 0)),
        ),
        compiler_params=pltpu.CompilerParams(
            dimension_semantics=("parallel",),
            vmem_limit_bytes=32 * 1024 * 1024,
        ),
    )(x2, w2, b2)

    out2 = out2[:n, :feat]
    return out2.reshape(orig_shape)


if __name__ == "__main__":
    key = jax.random.PRNGKey(0)
    N, C, H, W = 2, 4, 16, 16
    x = jax.random.normal(key, (N, C, H, W), dtype=jnp.float32)

    # Lazy-initialized parameters from the PyTorch module after first forward:
    # weight -> ones, bias -> zeros over normalized_shape = (C, H, W).
    weight = jnp.ones((C, H, W), dtype=jnp.float32)
    bias = jnp.zeros((C, H, W), dtype=jnp.float32)

    out = adaptive_layer_norm(x, weight, bias, eps=1e-5)
    out = jax.block_until_ready(out)

    # Silent correctness check against a plain-JAX reference.
    xf = x.reshape(N, -1)
    mean = jnp.mean(xf, axis=-1, keepdims=True)
    var = jnp.mean((xf - mean) ** 2, axis=-1, keepdims=True)
    ref = ((xf - mean) / jnp.sqrt(var + 1e-5)).reshape(x.shape)
    ref = ref * weight[None] + bias[None]
    assert out.shape == x.shape
    assert jnp.allclose(out, ref, atol=1e-5, rtol=1e-5)

    print("KERNEL_OK")
</pallas_src>

<mosaic_0001>
module attributes {stable_mosaic.version = 11 : i64} {
  func.func @_adaptive_layer_norm_kernel(%arg0: i32, %arg1: memref<8x1024xf32, #tpu.memory_space<vmem>>, %arg2: memref<1x1024xf32, #tpu.memory_space<vmem>>, %arg3: memref<1x1024xf32, #tpu.memory_space<vmem>>, %arg4: memref<8x1024xf32, #tpu.memory_space<vmem>>) attributes {dimension_semantics = [#tpu.dimension_semantics<parallel>], iteration_bounds = array<i64: 1>, scalar_prefetch = 0 : i64, scratch_operands = 0 : i64, tpu.core_type = #tpu.core_type<tc>, window_params = [{transform_indices = @transform_0, window_bounds = array<i64: 8, 1024>}, {pipeline_mode = #tpu.pipeline_mode<synchronous>, transform_indices = @transform_1, window_bounds = array<i64: 1, 1024>}, {pipeline_mode = #tpu.pipeline_mode<synchronous>, transform_indices = @transform_2, window_bounds = array<i64: 1, 1024>}, {transform_indices = @transform_3, window_bounds = array<i64: 8, 1024>}]} {
    %c0 = arith.constant 0 : index
    %c0_0 = arith.constant 0 : index
    %0 = vector.load %arg1[%c0, %c0_0] : memref<8x1024xf32, #tpu.memory_space<vmem>>, vector<8x1024xf32>
    %cst = arith.constant dense<0.000000e+00> : vector<8xf32>
    %1 = vector.multi_reduction <add>, %0, %cst [1] : vector<8x1024xf32> to vector<8xf32>
    %2 = vector.shape_cast %1 : vector<8xf32> to vector<8x1xf32>
    %cst_1 = arith.constant 9.765625E-4 : f32
    %3 = vector.broadcast %cst_1 : f32 to vector<8x1xf32>
    %4 = arith.mulf %2, %3 : vector<8x1xf32>
    %5 = vector.broadcast %4 : vector<8x1xf32> to vector<8x1024xf32>
    %6 = arith.subf %0, %5 : vector<8x1024xf32>
    %7 = arith.mulf %6, %6 : vector<8x1024xf32>
    %cst_2 = arith.constant dense<0.000000e+00> : vector<8xf32>
    %8 = vector.multi_reduction <add>, %7, %cst_2 [1] : vector<8x1024xf32> to vector<8xf32>
    %9 = vector.shape_cast %8 : vector<8xf32> to vector<8x1xf32>
    %cst_3 = arith.constant 9.765625E-4 : f32
    %10 = vector.broadcast %cst_3 : f32 to vector<8x1xf32>
    %11 = arith.mulf %9, %10 : vector<8x1xf32>
    %cst_4 = arith.constant 9.99999974E-6 : f32
    %12 = vector.broadcast %cst_4 : f32 to vector<8x1xf32>
    %13 = arith.addf %11, %12 : vector<8x1xf32>
    %14 = math.rsqrt %13 : vector<8x1xf32>
    %15 = vector.broadcast %14 : vector<8x1xf32> to vector<8x1024xf32>
    %16 = arith.mulf %6, %15 : vector<8x1024xf32>
    %c0_5 = arith.constant 0 : index
    %c0_6 = arith.constant 0 : index
    %17 = vector.load %arg2[%c0_5, %c0_6] : memref<1x1024xf32, #tpu.memory_space<vmem>>, vector<1x1024xf32>
    %18 = vector.broadcast %17 : vector<1x1024xf32> to vector<8x1024xf32>
    %19 = arith.mulf %16, %18 : vector<8x1024xf32>
    %c0_7 = arith.constant 0 : index
    %c0_8 = arith.constant 0 : index
    %20 = vector.load %arg3[%c0_7, %c0_8] : memref<1x1024xf32, #tpu.memory_space<vmem>>, vector<1x1024xf32>
    %21 = vector.broadcast %20 : vector<1x1024xf32> to vector<8x1024xf32>
    %22 = arith.addf %19, %21 : vector<8x1024xf32>
    %c0_9 = arith.constant 0 : index
    %c0_10 = arith.constant 0 : index
    %23 = vector.load %arg4[%c0_9, %c0_10] : memref<8x1024xf32, #tpu.memory_space<vmem>>, vector<8x1024xf32>
    tpu.vector_store %arg4[%c0_9, %c0_10], %22 {strides = array<i32>} : memref<8x1024xf32, #tpu.memory_space<vmem>>, vector<8x1024xf32>,
    return
  }
  func.func @transform_0(%arg0: i32) -> (i32, i32) {
    %c0_i32 = arith.constant 0 : i32
    %c0_i32_0 = arith.constant 0 : i32
    return %arg0, %c0_i32 : i32, i32
  }
  func.func @transform_1(%arg0: i32) -> (i32, i32) {
    %c0_i32 = arith.constant 0 : i32
    %c0_i32_0 = arith.constant 0 : i32
    %c0_i32_1 = arith.constant 0 : i32
    return %c0_i32, %c0_i32_0 : i32, i32
  }
  func.func @transform_2(%arg0: i32) -> (i32, i32) {
    %c0_i32 = arith.constant 0 : i32
    %c0_i32_0 = arith.constant 0 : i32
    %c0_i32_1 = arith.constant 0 : i32
    return %c0_i32, %c0_i32_0 : i32, i32
  }
  func.func @transform_3(%arg0: i32) -> (i32, i32) {
    %c0_i32 = arith.constant 0 : i32
    %c0_i32_0 = arith.constant 0 : i32
    return %arg0, %c0_i32 : i32, i32
  }
}

</mosaic_0001>

<llo_original>
// kernel: tpu_custom_call.1
$region0: #{tpu_custom_call.1}
  #allocation0 [shape = 'u32[]', space=smem, size = 0x4, offset = 0x4, fixed_abs, tag = 'smem constant byte address 0x4 - core index']
  #allocation1 [shape = 'u32[144,128]{1,0:T(1,128)}', space=vmem, size = 0x12000, scoped, tag = 'internal scratch']
  %s0 = inlined_call_operand.hbm [shape: f32[8,1024], index: 0, kind: input, shape index: {}]
  %s1 = inlined_call_operand.hbm [shape: f32[1,1024], index: 1, kind: input, shape index: {}]
  %s2 = inlined_call_operand.hbm [shape: f32[1,1024], index: 2, kind: input, shape index: {}]
  %s3 = inlined_call_operand.hbm [shape: f32[8,1024], index: 3, kind: output, shape index: {}]
  %s4 = sld [smem:[#allocation0]]
  $region34: #{tpu_custom_call.1} parent=0
    _
  %s6 = ssub.s32 1, %s4
  %s7 = scalar_select 0, %s6, %s4
  $region1: #{tpu_custom_call.1} parent=0
    #allocation2 [shape = 'u8[32768]{0}', space=vmem, size = 0x8000, scoped, tag = 'input window, operand 0, single buffered']
    #allocation3 [shape = 's32[1]{0}', space=sflag, size = 0x4, scoped, tag = 'scoped memory for tpu_custom_call.1']
    #allocation4 [shape = 's32[1]{0}', space=sflag, size = 0x4, scoped, tag = 'scoped memory for tpu_custom_call.1']
    #allocation5 [shape = 'u8[4096]{0}', space=vmem, size = 0x1000, scoped, tag = 'input window, operand 1, single buffered']
    #allocation6 [shape = 's32[1]{0}', space=sflag, size = 0x4, scoped, tag = 'scoped memory for tpu_custom_call.1']
    #allocation7 [shape = 'u8[4096]{0}', space=vmem, size = 0x1000, scoped, tag = 'input window, operand 2, single buffered']
    #allocation8 [shape = 'u8[32768]{0}', space=vmem, size = 0x8000, scoped, tag = 'output window, operand 0, single buffered']
    %8 = vsyncpa [#allocation3], 0
    %9 = vsyncpa [#allocation6], 0
    %10 = vsyncpa [#allocation4], 0
    // Predicated region
    $region2: #{tpu_custom_call.1} parent=1 // pred_check
      _
    $region3: #{tpu_custom_call.1} parent=1 // pred_check_branch
      %12 = sbr.rel (0) target = $region5
    $region4: #{tpu_custom_call.1} parent=1 // pred_region
      %s14 = ssub.s32 1024, 1024
      %15 = vsyncadd [#allocation3], %s14
      %s17 = sshll.u32 [#allocation2], 4
      %s18 = int_to_ptr.vmem [resolvable:$true] %s17
      %20 = dma.hbm_to_vmem [thread:$0]  %s0, 1024, %s18, [#allocation3]
    $region5: #{tpu_custom_call.1} parent=1 // pred_fallthru
      _
    // Predicated region
    $region6: #{tpu_custom_call.1} parent=1 // pred_check
      _
    $region7: #{tpu_custom_call.1} parent=1 // pred_check_branch
      %22 = sbr.rel (0) target = $region9
    $region8: #{tpu_custom_call.1} parent=1 // pred_region
      %s24 = ssub.s32 128, 128
      %25 = vsyncadd [#allocation6], %s24
      %s27 = sshll.u32 [#allocation5], 4
      %s28 = int_to_ptr.vmem [resolvable:$true] %s27
      %30 = dma.hbm_to_vmem [thread:$0]  %s1, 128, %s28, [#allocation6]
    $region9: #{tpu_custom_call.1} parent=1 // pred_fallthru
      _
    // Predicated region
    $region10: #{tpu_custom_call.1} parent=1 // pred_check
      _
    $region11: #{tpu_custom_call.1} parent=1 // pred_check_branch
      %32 = sbr.rel (0) target = $region13
    $region12: #{tpu_custom_call.1} parent=1 // pred_region
      %s34 = ssub.s32 128, 128
      %35 = vsyncadd [#allocation6], %s34
      %s37 = sshll.u32 [#allocation7], 4
      %s38 = int_to_ptr.vmem [resolvable:$true] %s37
      %40 = dma.hbm_to_vmem [thread:$0]  %s2, 128, %s38, [#allocation6]
    $region13: #{tpu_custom_call.1} parent=1 // pred_fallthru
      _
    // Predicated region
    $region14: #{tpu_custom_call.1} parent=1 // pred_check
      _
    $region15: #{tpu_custom_call.1} parent=1 // pred_check_branch
      %42 = sbr.rel (0) target = $region17
    $region16: #{tpu_custom_call.1} parent=1 // pred_region
      %43 = dma.done [#allocation3], 1024
    $region17: #{tpu_custom_call.1} parent=1 // pred_fallthru
      _
    // Predicated region
    $region18: #{tpu_custom_call.1} parent=1 // pred_check
      _
    $region19: #{tpu_custom_call.1} parent=1 // pred_check_branch
      %45 = sbr.rel (0) target = $region21
    $region20: #{tpu_custom_call.1} parent=1 // pred_region
      %46 = dma.done [#allocation6], 128
    $region21: #{tpu_custom_call.1} parent=1 // pred_fallthru
      _
    // Predicated region
    $region22: #{tpu_custom_call.1} parent=1 // pred_check
      _
    $region23: #{tpu_custom_call.1} parent=1 // pred_check_branch
      %48 = sbr.rel (0) target = $region25
    $region24: #{tpu_custom_call.1} parent=1 // pred_region
      %49 = dma.done [#allocation6], 128
    $region25: #{tpu_custom_call.1} parent=1 // pred_fallthru
      _
    %v50 = vld [vmem:[#allocation2] sm:$0xff]
    %v51 = vld [vmem:[#allocation2 + $0x8] sm:$0xff]
    %v52 = vld [vmem:[#allocation2 + $0x10] sm:$0xff]
    %v53 = vld [vmem:[#allocation2 + $0x18] sm:$0xff]
    %v54 = vld [vmem:[#allocation2 + $0x20] sm:$0xff]
    %v55 = vld [vmem:[#allocation2 + $0x28] sm:$0xff]
    %v56 = vld [vmem:[#allocation2 + $0x30] sm:$0xff]
    %v57 = vld [vmem:[#allocation2 + $0x38] sm:$0xff]
    %v58 = vadd.f32 %v50, %v51
    %v59 = vadd.f32 %v58, %v52
    %v60 = vadd.f32 %v59, %v53
    %v61 = vadd.f32 %v60, %v54
    %v62 = vadd.f32 %v61, %v55
    %v63 = vadd.f32 %v62, %v56
    %v64 = vadd.f32 %v63, %v57
    %65 = vadd.xlane.f32.xlu0 %v64
    %v66 = vpop.xlane.xlu0 %65
    %v67 = vmul.f32 %v66, 0.0009765625
    %v68 = vsub.f32 %v50, %v67
    %v69 = vsub.f32 %v51, %v67
    %v70 = vsub.f32 %v52, %v67
    %v71 = vsub.f32 %v53, %v67
    %v72 = vsub.f32 %v54, %v67
    %v73 = vsub.f32 %v55, %v67
    %v74 = vsub.f32 %v56, %v67
    %v75 = vsub.f32 %v57, %v67
    %v76 = vmul.f32 %v68, %v68
    %v77 = vmul.f32 %v69, %v69
    %v78 = vmul.f32 %v70, %v70
    %v79 = vmul.f32 %v71, %v71
    %v80 = vmul.f32 %v72, %v72
    %v81 = vmul.f32 %v73, %v73
    %v82 = vmul.f32 %v74, %v74
    %v83 = vmul.f32 %v75, %v75
    %v84 = vadd.f32 %v76, %v77
    %v85 = vadd.f32 %v84, %v78
    %v86 = vadd.f32 %v85, %v79
    %v87 = vadd.f32 %v86, %v80
    %v88 = vadd.f32 %v87, %v81
    %v89 = vadd.f32 %v88, %v82
    %v90 = vadd.f32 %v89, %v83
    %91 = vadd.xlane.f32.xlu0 %v90
    %v92 = vpop.xlane.xlu0 %91
    %v93 = vmul.f32 %v92, 0.0009765625
    %v94 = vadd.f32 %v93, 1e-05
    %v95 = vrsqrt.pop %v94
    %v96 = vmul.f32 %v68, %v95
    %v97 = vmul.f32 %v69, %v95
    %v98 = vmul.f32 %v70, %v95
    %v99 = vmul.f32 %v71, %v95
    %v100 = vmul.f32 %v72, %v95
    %v101 = vmul.f32 %v73, %v95
    %v102 = vmul.f32 %v74, %v95
    %v103 = vmul.f32 %v75, %v95
    %v104 = vld [vmem:[#allocation5] sm:$0xff]
    %v106 = vlaneseq
    %v107 = vshrl.u32 %v106, 7
    %v108 = vsub.s32 0, %v107
    %v109 = vrot.slane %v104, %v108
    %v110 = vlaneseq
    %v111 = vshrl.u32 %v110, 7
    %v112 = vsub.s32 1, %v111
    %v113 = vrot.slane %v104, %v112
    %v114 = vlaneseq
    %v115 = vshrl.u32 %v114, 7
    %v116 = vsub.s32 2, %v115
    %v117 = vrot.slane %v104, %v116
    %v118 = vlaneseq
    %v119 = vshrl.u32 %v118, 7
    %v120 = vsub.s32 3, %v119
    %v121 = vrot.slane %v104, %v120
    %v122 = vlaneseq
    %v123 = vshrl.u32 %v122, 7
    %v124 = vsub.s32 4, %v123
    %v125 = vrot.slane %v104, %v124
    %v126 = vlaneseq
    %v127 = vshrl.u32 %v126, 7
    %v128 = vsub.s32 5, %v127
    %v129 = vrot.slane %v104, %v128
    %v130 = vlaneseq
    %v131 = vshrl.u32 %v130, 7
    %v132 = vsub.s32 6, %v131
    %v133 = vrot.slane %v104, %v132
    %v134 = vlaneseq
    %v135 = vshrl.u32 %v134, 7
    %v136 = vsub.s32 7, %v135
    %v137 = vrot.slane %v104, %v136
    %v146 = vmul.f32 %v96, %v109
    %v147 = vmul.f32 %v97, %v113
    %v148 = vmul.f32 %v98, %v117
    %v149 = vmul.f32 %v99, %v121
    %v150 = vmul.f32 %v100, %v125
    %v151 = vmul.f32 %v101, %v129
    %v152 = vmul.f32 %v102, %v133
    %v153 = vmul.f32 %v103, %v137
    %v154 = vld [vmem:[#allocation7] sm:$0xff]
    %v156 = vlaneseq
    %v157 = vshrl.u32 %v156, 7
    %v158 = vsub.s32 0, %v157
    %v159 = vrot.slane %v154, %v158
    %v160 = vlaneseq
    %v161 = vshrl.u32 %v160, 7
    %v162 = vsub.s32 1, %v161
    %v163 = vrot.slane %v154, %v162
    %v164 = vlaneseq
    %v165 = vshrl.u32 %v164, 7
    %v166 = vsub.s32 2, %v165
    %v167 = vrot.slane %v154, %v166
    %v168 = vlaneseq
    %v169 = vshrl.u32 %v168, 7
    %v170 = vsub.s32 3, %v169
    %v171 = vrot.slane %v154, %v170
    %v172 = vlaneseq
    %v173 = vshrl.u32 %v172, 7
    %v174 = vsub.s32 4, %v173
    %v175 = vrot.slane %v154, %v174
    %v176 = vlaneseq
    %v177 = vshrl.u32 %v176, 7
    %v178 = vsub.s32 5, %v177
    %v179 = vrot.slane %v154, %v178
    %v180 = vlaneseq
    %v181 = vshrl.u32 %v180, 7
    %v182 = vsub.s32 6, %v181
    %v183 = vrot.slane %v154, %v182
    %v184 = vlaneseq
    %v185 = vshrl.u32 %v184, 7
    %v186 = vsub.s32 7, %v185
    %v187 = vrot.slane %v154, %v186
    %v196 = vadd.f32 %v146, %v159
    %v197 = vadd.f32 %v147, %v163
    %v198 = vadd.f32 %v148, %v167
    %v199 = vadd.f32 %v149, %v171
    %v200 = vadd.f32 %v150, %v175
    %v201 = vadd.f32 %v151, %v179
    %v202 = vadd.f32 %v152, %v183
    %v203 = vadd.f32 %v153, %v187
    %204 = vst [vmem:[#allocation8] sm:$0xff] %v196
    %205 = vst [vmem:[#allocation8 + $0x8] sm:$0xff] %v197
    %206 = vst [vmem:[#allocation8 + $0x10] sm:$0xff] %v198
    %207 = vst [vmem:[#allocation8 + $0x18] sm:$0xff] %v199
    %208 = vst [vmem:[#allocation8 + $0x20] sm:$0xff] %v200
    %209 = vst [vmem:[#allocation8 + $0x28] sm:$0xff] %v201
    %210 = vst [vmem:[#allocation8 + $0x30] sm:$0xff] %v202
    %211 = vst [vmem:[#allocation8 + $0x38] sm:$0xff] %v203
    // Predicated region
    $region26: #{tpu_custom_call.1} parent=1 // pred_check
      _
    $region27: #{tpu_custom_call.1} parent=1 // pred_check_branch
      %213 = sbr.rel (0) target = $region29
    $region28: #{tpu_custom_call.1} parent=1 // pred_region
      %s215 = ssub.s32 1024, 1024
      %216 = vsyncadd [#allocation4], %s215
      %s218 = sshll.u32 [#allocation8], 4
      %s219 = int_to_ptr.vmem [resolvable:$true] %s218
      %221 = dma.vmem_to_hbm [thread:$0]  %s219, 1024, %s3, [#allocation4]
    $region29: #{tpu_custom_call.1} parent=1 // pred_fallthru
      _
    // Predicated region
    $region30: #{tpu_custom_call.1} parent=1 // pred_check
      _
    $region31: #{tpu_custom_call.1} parent=1 // pred_check_branch
      %223 = sbr.rel (0) target = $region33
    $region32: #{tpu_custom_call.1} parent=1 // pred_region
      %224 = dma.done [#allocation4], 1024
    $region33: #{tpu_custom_call.1} parent=1 // pred_fallthru
      _
    %225 = vsyncpa [#allocation3], 1
    %226 = vsyncpa [#allocation6], 1
    %227 = vsyncpa [#allocation4], 1

</llo_original>
